<compile_context>
chip_gen: v7x
topology: tpu7x:2x2x1
jax: 0.10.0
libtpu: 0.0.40
codegen_flags: <defaults>
</compile_context>

<pallas_src>
import functools

import jax
import jax.numpy as jnp
from jax.experimental import pallas as pl
from jax.experimental.pallas import tpu as pltpu

LANE = 128          # lane width: pad feature / hidden / class dims to this
NEG_INF = -1e30     # fill for padded class logits


def _round_up(x, m):
    return ((x + m - 1) // m) * m


def _pick_tile(n_pad, candidates):
    for c in candidates:
        if n_pad % c == 0:
            return c
    return 128


def _pad_mat(w, rows=LANE, cols=LANE):
    out = jnp.zeros((rows, cols), jnp.float32)
    return out.at[: w.shape[0], : w.shape[1]].set(w.astype(jnp.float32))


def _pad_bias(b, fill=0.0):
    out = jnp.full((1, LANE), fill, jnp.float32)
    return out.at[:, : b.shape[1]].set(b.astype(jnp.float32))


# ----------------------------------------------------------------------------
# Pallas kernel: one GCN layer (optionally fused with fc + log_softmax).
#   grid = (row_tiles, k_tiles);  acc[row_tile] += A[row, k] @ Z[k]
#   Z is whole-array resident in VMEM; the k-slice is taken in-kernel.
#   finalize:  H = relu(d * (acc @ W) + b)
#              last layer:  out = log_softmax(H @ Wfc + bfc)
#              else:        out = (d * H).astype(bf16)   # next layer's Z
# ----------------------------------------------------------------------------
def gcn_layer_kernel(adj_ref, z_ref, d_ref, w_ref, b_ref, *rest,
                     last_layer, tk):
    if last_layer:
        wfc_ref, bfc_ref, out_ref, acc_ref = rest
    else:
        out_ref, acc_ref = rest

    k = pl.program_id(1)

    @pl.when(k == 0)
    def _():
        acc_ref[...] = jnp.zeros_like(acc_ref)

    # The only N^2-scale matmul: bf16 inputs, f32 accumulation on the MXU.
    k0 = pl.multiple_of(k * tk, tk)
    z_blk = z_ref[pl.ds(k0, tk), :]                      # (tk, 128) bf16, VMEM-resident
    acc_ref[...] += jnp.dot(adj_ref[...], z_blk,
                            preferred_element_type=jnp.float32)

    @pl.when(k == pl.num_programs(1) - 1)
    def _():
        d = d_ref[...]                                   # (TM, 1) f32 = deg^-1/2
        # (A @ Z) @ W ordering: tiny (TM,128)x(128,128) matmul, f32.
        h = jnp.dot(acc_ref[...], w_ref[...],
                    preferred_element_type=jnp.float32)
        h = jnp.maximum(d * h + b_ref[...], 0.0)         # row norm + bias + relu

        if last_layer:
            logits = jnp.dot(h, wfc_ref[...],
                             preferred_element_type=jnp.float32) + bfc_ref[...]
            m = jnp.max(logits, axis=1, keepdims=True)
            s = logits - m
            lse = jnp.log(jnp.sum(jnp.exp(s), axis=1, keepdims=True))
            out_ref[...] = (s - lse).astype(out_ref.dtype)
        else:
            # Pre-scale for the next layer's aggregation: Z_{l+1} = d * H_l.
            out_ref[...] = (d * h).astype(out_ref.dtype)


def _gcn_layer_call(adj, z, d, w, b, wfc=None, bfc=None, *, last_layer, tm, tk):
    n_pad = adj.shape[0]
    grid = (n_pad // tm, n_pad // tk)
    out_dtype = jnp.float32 if last_layer else jnp.bfloat16

    in_specs = [
        pl.BlockSpec((tm, tk), lambda i, k: (i, k)),        # adj tile (streamed bf16)
        pl.BlockSpec((n_pad, LANE), lambda i, k: (0, 0)),   # Z fully resident (bf16)
        pl.BlockSpec((tm, 1), lambda i, k: (i, 0)),         # d row-tile (f32)
        pl.BlockSpec((LANE, LANE), lambda i, k: (0, 0)),    # W  (resident)
        pl.BlockSpec((1, LANE), lambda i, k: (0, 0)),       # b
    ]
    args = [adj, z, d, w, b]
    if last_layer:
        in_specs += [
            pl.BlockSpec((LANE, LANE), lambda i, k: (0, 0)),  # Wfc
            pl.BlockSpec((1, LANE), lambda i, k: (0, 0)),     # bfc
        ]
        args += [wfc, bfc]

    flops = (2 * n_pad * n_pad * LANE
             + 2 * n_pad * LANE * LANE * (2 if last_layer else 1))
    bytes_accessed = (adj.size * 2                       # adjacency, streamed once
                      + z.size * 2                       # Z, resident -> read once
                      + d.size * 4
                      + (4 if last_layer else 2) * LANE * LANE * 4
                      + n_pad * LANE * (4 if last_layer else 2))

    return pl.pallas_call(
        functools.partial(gcn_layer_kernel, last_layer=last_layer, tk=tk),
        out_shape=jax.ShapeDtypeStruct((n_pad, LANE), out_dtype),
        grid_spec=pltpu.PrefetchScalarGridSpec(
            num_scalar_prefetch=0,
            grid=grid,
            in_specs=in_specs,
            out_specs=pl.BlockSpec((tm, LANE), lambda i, k: (i, 0)),
            scratch_shapes=[pltpu.VMEM((tm, LANE), jnp.float32)],
        ),
        compiler_params=pltpu.CompilerParams(
            dimension_semantics=("parallel", "arbitrary"),   # megacore rows on v7x
            vmem_limit_bytes=48 * 1024 * 1024,               # fits v5e/v6e/v7x
        ),
        cost_estimate=pl.CostEstimate(
            flops=int(flops),
            transcendentals=int(n_pad * LANE) if last_layer else 0,
            bytes_accessed=int(bytes_accessed),
        ),
    )(*args)


# ----------------------------------------------------------------------------
# Glue: build binary adjacency (bf16) + f32 degree scale, pad, chain layers.
# ----------------------------------------------------------------------------
def build_gcn_inputs(edge_index, num_nodes, n_pad):
    src, dst = edge_index[0], edge_index[1]
    a = jnp.zeros((num_nodes, num_nodes), jnp.float32)
    # Binary adjacency (duplicate edges collapse), edge j->i fills row i.
    a = a.at[dst, src].set(1.0)
    # Self loops (binary, even if self-edges already present).
    a = jnp.maximum(a, jnp.eye(num_nodes, dtype=jnp.float32))
    deg = jnp.sum(a, axis=1)
    d = jnp.where(deg > 0, jax.lax.rsqrt(deg), 0.0)

    adj_pad = jnp.zeros((n_pad, n_pad), jnp.bfloat16)
    adj_pad = adj_pad.at[:num_nodes, :num_nodes].set(a.astype(jnp.bfloat16))
    d_pad = jnp.zeros((n_pad, 1), jnp.float32).at[:num_nodes, 0].set(d)
    return adj_pad, d_pad


def gnn_forward(x, edge_index, params):
    n, f = x.shape
    num_classes = params["wfc"].shape[1]
    n_pad = _round_up(max(n, LANE), LANE)
    tm = _pick_tile(n_pad, (256, 128))        # row tile (output / accumulator)
    tk = _pick_tile(n_pad, (512, 256, 128))   # reduction tile (adjacency cols)

    adj, d = build_gcn_inputs(edge_index, n, n_pad)

    # Lane-pad features and pre-scale: Z0 = D^{-1/2} X  (bf16 MXU input).
    x_pad = jnp.zeros((n_pad, LANE), jnp.float32).at[:n, :f].set(x)
    z = (d * x_pad).astype(jnp.bfloat16)

    w1, b1 = _pad_mat(params["w1"]), _pad_bias(params["b1"])
    w2, b2 = _pad_mat(params["w2"]), _pad_bias(params["b2"])
    w3, b3 = _pad_mat(params["w3"]), _pad_bias(params["b3"])
    wfc = _pad_mat(params["wfc"])
    bfc = _pad_bias(params["bfc"], fill=NEG_INF)   # padded classes drop out of softmax

    z = _gcn_layer_call(adj, z, d, w1, b1, last_layer=False, tm=tm, tk=tk)
    z = _gcn_layer_call(adj, z, d, w2, b2, last_layer=False, tm=tm, tk=tk)
    out = _gcn_layer_call(adj, z, d, w3, b3, wfc, bfc, last_layer=True, tm=tm, tk=tk)
    return out[:n, :num_classes]


# ----------------------------------------------------------------------------
# Pure-JAX reference (mirrors the kernel's bf16 casts for a tight comparison).
# ----------------------------------------------------------------------------
def gnn_reference(x, edge_index, params):
    n = x.shape[0]
    src, dst = edge_index[0], edge_index[1]
    a = jnp.zeros((n, n), jnp.float32).at[dst, src].set(1.0)
    a = jnp.maximum(a, jnp.eye(n, dtype=jnp.float32))
    deg = jnp.sum(a, axis=1)
    d = jnp.where(deg > 0, jax.lax.rsqrt(deg), 0.0)[:, None]
    adj = a.astype(jnp.bfloat16)

    def layer(z_bf16, w, b):
        agg = jnp.dot(adj, z_bf16, preferred_element_type=jnp.float32)
        h = jnp.dot(agg, w, preferred_element_type=jnp.float32)
        return jnp.maximum(d * h + b, 0.0)

    z = (d * x).astype(jnp.bfloat16)
    h1 = layer(z, params["w1"], params["b1"])
    z = (d * h1).astype(jnp.bfloat16)
    h2 = layer(z, params["w2"], params["b2"])
    z = (d * h2).astype(jnp.bfloat16)
    h3 = layer(z, params["w3"], params["b3"])
    logits = jnp.dot(h3, params["wfc"], preferred_element_type=jnp.float32) + params["bfc"]
    return jax.nn.log_softmax(logits, axis=1)


def init_params(key, num_node_features, num_classes, hidden=16):
    ks = jax.random.split(key, 8)

    def glorot(k, fan_in, fan_out):
        limit = jnp.sqrt(6.0 / (fan_in + fan_out))
        return jax.random.uniform(k, (fan_in, fan_out), jnp.float32, -limit, limit)

    return {
        "w1": glorot(ks[0], num_node_features, hidden),
        "b1": jnp.zeros((1, hidden), jnp.float32),
        "w2": glorot(ks[1], hidden, hidden),
        "b2": jnp.zeros((1, hidden), jnp.float32),
        "w3": glorot(ks[2], hidden, hidden),
        "b3": jnp.zeros((1, hidden), jnp.float32),
        "wfc": glorot(ks[3], hidden, num_classes),
        "bfc": 0.01 * jax.random.normal(ks[4], (1, num_classes), jnp.float32),
    }


if __name__ == "__main__":
    key = jax.random.PRNGKey(0)
    k_x, k_e, k_p = jax.random.split(key, 3)

    num_nodes = 300          # pads to 384 -> grid (3, 3) with 128x128 adj tiles
    num_node_features = 8
    num_classes = 4
    num_edges = 1200

    x = jax.random.normal(k_x, (num_nodes, num_node_features), jnp.float32)
    edge_index = jax.random.randint(k_e, (2, num_edges), 0, num_nodes, jnp.int32)
    params = init_params(k_p, num_node_features, num_classes)

    out = jax.block_until_ready(gnn_forward(x, edge_index, params))
    ref = jax.block_until_ready(gnn_reference(x, edge_index, params))

    assert out.shape == (num_nodes, num_classes)
    # rows of log_softmax should exp-sum to ~1
    assert bool(jnp.allclose(jnp.sum(jnp.exp(out), axis=1), 1.0, atol=1e-3))
    # match pure-JAX reference
    assert bool(jnp.allclose(out, ref, atol=1e-2, rtol=1e-2)), \
        float(jnp.max(jnp.abs(out - ref)))

    print("KERNEL_OK")
</pallas_src>

<mosaic_0001>
module attributes {stable_mosaic.version = 11 : i64} {
  func.func @gcn_layer_kernel(%arg0: i32, %arg1: i32, %arg2: memref<128x128xbf16, #tpu.memory_space<vmem>>, %arg3: memref<384x128xbf16, #tpu.memory_space<vmem>>, %arg4: memref<128x1xf32, #tpu.memory_space<vmem>>, %arg5: memref<128x128xf32, #tpu.memory_space<vmem>>, %arg6: memref<1x128xf32, #tpu.memory_space<vmem>>, %arg7: memref<128x128xbf16, #tpu.memory_space<vmem>>, %arg8: memref<128x128xf32, #tpu.memory_space<vmem>>) attributes {dimension_semantics = [#tpu.dimension_semantics<parallel>, #tpu.dimension_semantics<arbitrary>], iteration_bounds = array<i64: 3, 3>, scalar_prefetch = 0 : i64, scratch_operands = 1 : i64, tpu.core_type = #tpu.core_type<tc>, window_params = [{transform_indices = @transform_0, window_bounds = array<i64: 128, 128>}, {pipeline_mode = #tpu.pipeline_mode<synchronous>, transform_indices = @transform_1, window_bounds = array<i64: 384, 128>}, {transform_indices = @transform_2, window_bounds = array<i64: 128, 1>}, {pipeline_mode = #tpu.pipeline_mode<synchronous>, transform_indices = @transform_3, window_bounds = array<i64: 128, 128>}, {pipeline_mode = #tpu.pipeline_mode<synchronous>, transform_indices = @transform_4, window_bounds = array<i64: 1, 128>}, {transform_indices = @transform_5, window_bounds = array<i64: 128, 128>}]} {
    %c0_i32 = arith.constant 0 : i32
    %0 = arith.cmpi eq, %arg1, %c0_i32 : i32
    %1 = arith.extui %0 : i1 to i32
    %c0_i32_0 = arith.constant 0 : i32
    %2 = arith.cmpi ne, %1, %c0_i32_0 : i32
    scf.if %2 {
      %cst_8 = arith.constant 0.000000e+00 : f32
      %15 = vector.broadcast %cst_8 : f32 to vector<128x128xf32>
      %c0_9 = arith.constant 0 : index
      %c0_10 = arith.constant 0 : index
      %16 = vector.load %arg8[%c0_9, %c0_10] : memref<128x128xf32, #tpu.memory_space<vmem>>, vector<128x128xf32>
      tpu.vector_store %arg8[%c0_9, %c0_10], %15 {strides = array<i32>} : memref<128x128xf32, #tpu.memory_space<vmem>>, vector<128x128xf32>,
    } else {
    }
    %c128_i32 = arith.constant 128 : i32
    %3 = arith.muli %arg1, %c128_i32 : i32
    %4 = tpu.assume_multiple %3, 128 : i32
    %5 = arith.index_cast %4 : i32 to index
    %c0 = arith.constant 0 : index
    %6 = vector.load %arg3[%5, %c0] : memref<384x128xbf16, #tpu.memory_space<vmem>>, vector<128x128xbf16>
    %c0_1 = arith.constant 0 : index
    %c0_2 = arith.constant 0 : index
    %7 = vector.load %arg8[%c0_1, %c0_2] : memref<128x128xf32, #tpu.memory_space<vmem>>, vector<128x128xf32>
    %c0_3 = arith.constant 0 : index
    %c0_4 = arith.constant 0 : index
    %8 = vector.load %arg2[%c0_3, %c0_4] : memref<128x128xbf16, #tpu.memory_space<vmem>>, vector<128x128xbf16>
    %cst = arith.constant dense<0.000000e+00> : vector<128x128xf32>
    %9 = tpu.matmul %8, %6, %cst {dimension_numbers = #tpu.dot_dimension_numbers<[1], [0], [0], [1], [0, 0, 1, 1], [], []>} : vector<128x128xbf16>, vector<128x128xbf16>, vector<128x128xf32> -> vector<128x128xf32>
    %10 = arith.addf %7, %9 : vector<128x128xf32>
    %c0_5 = arith.constant 0 : index
    %c0_6 = arith.constant 0 : index
    %11 = vector.load %arg8[%c0_5, %c0_6] : memref<128x128xf32, #tpu.memory_space<vmem>>, vector<128x128xf32>
    tpu.vector_store %arg8[%c0_5, %c0_6], %10 {strides = array<i32>} : memref<128x128xf32, #tpu.memory_space<vmem>>, vector<128x128xf32>,
    %c2_i32 = arith.constant 2 : i32
    %12 = arith.cmpi eq, %arg1, %c2_i32 : i32
    %13 = arith.extui %12 : i1 to i32
    %c0_i32_7 = arith.constant 0 : i32
    %14 = arith.cmpi ne, %13, %c0_i32_7 : i32
    scf.if %14 {
      %c0_8 = arith.constant 0 : index
      %c0_9 = arith.constant 0 : index
      %15 = vector.load %arg4[%c0_8, %c0_9] : memref<128x1xf32, #tpu.memory_space<vmem>>, vector<128x1xf32>
      %c0_10 = arith.constant 0 : index
      %c0_11 = arith.constant 0 : index
      %16 = vector.load %arg8[%c0_10, %c0_11] : memref<128x128xf32, #tpu.memory_space<vmem>>, vector<128x128xf32>
      %c0_12 = arith.constant 0 : index
      %c0_13 = arith.constant 0 : index
      %17 = vector.load %arg5[%c0_12, %c0_13] : memref<128x128xf32, #tpu.memory_space<vmem>>, vector<128x128xf32>
      %cst_14 = arith.constant dense<0.000000e+00> : vector<128x128xf32>
      %18 = tpu.matmul %16, %17, %cst_14 {dimension_numbers = #tpu.dot_dimension_numbers<[1], [0], [0], [1], [0, 0, 1, 1], [], []>} : vector<128x128xf32>, vector<128x128xf32>, vector<128x128xf32> -> vector<128x128xf32>
      %19 = vector.broadcast %15 : vector<128x1xf32> to vector<128x128xf32>
      %20 = arith.mulf %19, %18 : vector<128x128xf32>
      %c0_15 = arith.constant 0 : index
      %c0_16 = arith.constant 0 : index
      %21 = vector.load %arg6[%c0_15, %c0_16] : memref<1x128xf32, #tpu.memory_space<vmem>>, vector<1x128xf32>
      %22 = vector.broadcast %21 : vector<1x128xf32> to vector<128x128xf32>
      %23 = arith.addf %20, %22 : vector<128x128xf32>
      %cst_17 = arith.constant 0.000000e+00 : f32
      %24 = vector.broadcast %cst_17 : f32 to vector<128x128xf32>
      %25 = arith.maximumf %23, %24 : vector<128x128xf32>
      %26 = vector.broadcast %15 : vector<128x1xf32> to vector<128x128xf32>
      %27 = arith.mulf %26, %25 : vector<128x128xf32>
      %28 = arith.truncf %27 : vector<128x128xf32> to vector<128x128xbf16>
      %c0_18 = arith.constant 0 : index
      %c0_19 = arith.constant 0 : index
      %29 = vector.load %arg7[%c0_18, %c0_19] : memref<128x128xbf16, #tpu.memory_space<vmem>>, vector<128x128xbf16>
      tpu.vector_store %arg7[%c0_18, %c0_19], %28 {strides = array<i32>} : memref<128x128xbf16, #tpu.memory_space<vmem>>, vector<128x128xbf16>,
    } else {
    }
    return
  }
  func.func @transform_0(%arg0: i32, %arg1: i32) -> (i32, i32) {
    %c0_i32 = arith.constant 0 : i32
    return %arg0, %arg1 : i32, i32
  }
  func.func @transform_1(%arg0: i32, %arg1: i32) -> (i32, i32) {
    %c0_i32 = arith.constant 0 : i32
    %c0_i32_0 = arith.constant 0 : i32
    %c0_i32_1 = arith.constant 0 : i32
    return %c0_i32, %c0_i32_0 : i32, i32
  }
  func.func @transform_2(%arg0: i32, %arg1: i32) -> (i32, i32) {
    %c0_i32 = arith.constant 0 : i32
    %c0_i32_0 = arith.constant 0 : i32
    return %arg0, %c0_i32 : i32, i32
  }
  func.func @transform_3(%arg0: i32, %arg1: i32) -> (i32, i32) {
    %c0_i32 = arith.constant 0 : i32
    %c0_i32_0 = arith.constant 0 : i32
    %c0_i32_1 = arith.constant 0 : i32
    return %c0_i32, %c0_i32_0 : i32, i32
  }
  func.func @transform_4(%arg0: i32, %arg1: i32) -> (i32, i32) {
    %c0_i32 = arith.constant 0 : i32
    %c0_i32_0 = arith.constant 0 : i32
    %c0_i32_1 = arith.constant 0 : i32
    return %c0_i32, %c0_i32_0 : i32, i32
  }
  func.func @transform_5(%arg0: i32, %arg1: i32) -> (i32, i32) {
    %c0_i32 = arith.constant 0 : i32
    %c0_i32_0 = arith.constant 0 : i32
    return %arg0, %c0_i32 : i32, i32
  }
}

</mosaic_0001>

<llo_original>
// kernel: tpu_custom_call.1
$region0: #{tpu_custom_call.1}
  #allocation0 [shape = 'u32[]', space=smem, size = 0x4, offset = 0x4, fixed_abs, tag = 'smem constant byte address 0x4 - core index']
  #allocation1 [shape = 'u32[144,128]{1,0:T(1,128)}', space=vmem, size = 0x12000, scoped, tag = 'internal scratch']
  #allocation2 [shape = 'f32[128,128]{1,0:T(8,128)}', space=vmem, size = 0x10000, scoped, tag = 'scratch operand']
  %s0 = inlined_call_operand.hbm [shape: bf16[384,384], index: 0, kind: input, shape index: {}]
  %s1 = inlined_call_operand.vmem [shape: bf16[384,128], index: 1, kind: input, shape index: {}]
  %s2 = inlined_call_operand.vmem [shape: f32[384,1], index: 2, kind: input, shape index: {}]
  %s3 = inlined_call_operand.vmem [shape: f32[128,128], index: 3, kind: input, shape index: {}]
  %s4 = inlined_call_operand.vmem [shape: f32[1,128], index: 4, kind: input, shape index: {}]
  %s5 = inlined_call_operand.hbm [shape: bf16[384,128], index: 5, kind: output, shape index: {}]
  %s6 = sld [smem:[#allocation0]]
  $region65: #{tpu_custom_call.1} parent=0
    _
  %s8 = ssub.s32 1, %s6
  %s9 = scalar_select 0, %s8, %s6
  $region1: #{tpu_custom_call.1} parent=0
    #allocation3 [shape = 'u8[65536]{0}', space=vmem, size = 0x10000, scoped, tag = 'input window, operand 0']
    #allocation4 [shape = 's32[2]{0}', space=sflag, size = 0x8, scoped, tag = 'scoped memory for tpu_custom_call.1']
    #allocation5 [shape = 's32[2]{0}', space=sflag, size = 0x8, scoped, tag = 'scoped memory for tpu_custom_call.1']
    #allocation6 [shape = 'u8[65536]{0}', space=vmem, size = 0x10000, scoped, tag = 'output window, operand 0']
    %10 = vsyncpa [#allocation4], 0
    %s11 = scalar_lea.sflag [#allocation4], 1
    %12 = vsyncpa %s11, 0
    %13 = vsyncpa [#allocation5], 0
    %s14 = scalar_lea.sflag [#allocation5], 1
    %15 = vsyncpa %s14, 0
    loop: start=0, step=1, limit=11
    $region2: #{tpu_custom_call.1} parent=1 // loop_pre_header
      _
    $region3: #{tpu_custom_call.1} parent=1 // loop_header
      %s17 = sphi 0, %s21
      %p18 = scmp.ge.s32.totalorder %s17, 11
      %s24 = sphi 0, %s36
      %s25 = sphi 0, %s32
      %s26 = sphi 0, %s24
      %s27 = sphi 0, %s25
      %s28 = sphi 0, %s26
      %s29 = sphi 0, %s27
      %s41 = sphi 0, %s43
      %s44 = sphi 0, %s41
      %s45 = sphi 0, %s44
      %s61 = sphi 0, %s45
      %s65 = sphi 0, %s65
      %s67 = sphi 0, %s65
      %s68 = sphi 0, %s67
      %s82 = sphi 0, %s68
      %s88 = sphi 0, %s90
      %s91 = sphi 0, %s88
      %s92 = sphi 0, %s91
      %s108 = sphi 0, %s92
      %s112 = sphi 0, %s112
      %s114 = sphi 0, %s112
      %s115 = sphi 0, %s114
      %s129 = sphi 0, %s115
      %s133 = sphi 0, %s133
      %s135 = sphi 0, %s133
      %s136 = sphi 0, %s135
      %s150 = sphi 0, %s136
      %s156 = sphi 0, %s158
      %s159 = sphi 0, %s156
      %s160 = sphi 0, %s159
      %s176 = sphi 0, %s160
    $region4: #{tpu_custom_call.1} parent=1 // loop_header_branch
      %20 = sbr.rel (%p18) target = $region8
    $region5: #{tpu_custom_call.1} parent=1 // loop_body
      %s22 = ssub.s32 %s17, 1
      %s23 = ssub.s32 %s17, 2
      %s30 = sadd.s32 1, %s25
      %p31 = scmp.ge.s32.totalorder %s30, 3
      %s32 = scalar_select %p31, 0, %s30
      %s33 = sadd.s32 1, %s24
      %s34 = scalar_select %p31, %s33, %s24
      %p35 = scmp.ge.s32.totalorder %s34, 3
      %s36 = scalar_select %p35, 0, %s34
      %s37 = ssub.s32 %s24, %s36
      %s38 = ssub.s32 %s25, %s32
      %s39 = sor.u32 %s37, %s38
      %p40 = scmp.eq.s32.totalorder %s39, 0
      %s42 = sadd.s32 %s41, 1
      %s43 = scalar_select %p40, %s41, %s42
      %p46 = pneg %p40
      %p47 = scmp.eq.s32.totalorder %s17, 8
      %p48 = por %p46, %p47
      %p49 = scmp.ne.s32.totalorder %s41, %s44
      %p50 = scmp.eq.s32.totalorder %s17, 0
      %p51 = por %p49, %p50
      %p52 = scmp.ne.s32.totalorder %s41, %s44
      %p53 = scmp.eq.s32.totalorder %s22, 8
      %p54 = por %p52, %p53
      %p55 = scmp.ne.s32.totalorder %s44, %s45
      %p56 = scmp.eq.s32.totalorder %s22, 0
      %p57 = por %p55, %p56
      %p58 = scmp.ne.s32.totalorder %s44, %s45
      %p59 = scmp.eq.s32.totalorder %s23, 8
      %p60 = por %p58, %p59
      %p62 = scmp.ne.s32.totalorder %s45, %s61
      %p63 = scmp.eq.s32.totalorder %s23, 0
      %p64 = por %p62, %p63
      %s66 = sadd.s32 %s65, 1
      %p69 = scmp.eq.s32.totalorder %s17, 8
      %p70 = scmp.ne.s32.totalorder %s65, %s67
      %p71 = scmp.eq.s32.totalorder %s17, 0
      %p72 = por %p70, %p71
      %p73 = scmp.ne.s32.totalorder %s65, %s67
      %p74 = scmp.eq.s32.totalorder %s22, 8
      %p75 = por %p73, %p74
      %p76 = scmp.ne.s32.totalorder %s67, %s68
      %p77 = scmp.eq.s32.totalorder %s22, 0
      %p78 = por %p76, %p77
      %p79 = scmp.ne.s32.totalorder %s67, %s68
      %p80 = scmp.eq.s32.totalorder %s23, 8
      %p81 = por %p79, %p80
      %p83 = scmp.ne.s32.totalorder %s68, %s82
      %p84 = scmp.eq.s32.totalorder %s23, 0
      %p85 = por %p83, %p84
      %s86 = ssub.s32 %s24, %s36
      %p87 = scmp.eq.s32.totalorder %s86, 0
      %s89 = sadd.s32 %s88, 1
      %s90 = scalar_select %p87, %s88, %s89
      %p93 = pneg %p87
      %p94 = scmp.eq.s32.totalorder %s17, 8
      %p95 = por %p93, %p94
      %p96 = scmp.ne.s32.totalorder %s88, %s91
      %p97 = scmp.eq.s32.totalorder %s17, 0
      %p98 = por %p96, %p97
      %p99 = scmp.ne.s32.totalorder %s88, %s91
      %p100 = scmp.eq.s32.totalorder %s22, 8
      %p101 = por %p99, %p100
      %p102 = scmp.ne.s32.totalorder %s91, %s92
      %p103 = scmp.eq.s32.totalorder %s22, 0
      %p104 = por %p102, %p103
      %p105 = scmp.ne.s32.totalorder %s91, %s92
      %p106 = scmp.eq.s32.totalorder %s23, 8
      %p107 = por %p105, %p106
      %p109 = scmp.ne.s32.totalorder %s92, %s108
      %p110 = scmp.eq.s32.totalorder %s23, 0
      %p111 = por %p109, %p110
      %s113 = sadd.s32 %s112, 1
      %p116 = scmp.eq.s32.totalorder %s17, 8
      %p117 = scmp.ne.s32.totalorder %s112, %s114
      %p118 = scmp.eq.s32.totalorder %s17, 0
      %p119 = por %p117, %p118
      %p120 = scmp.ne.s32.totalorder %s112, %s114
      %p121 = scmp.eq.s32.totalorder %s22, 8
      %p122 = por %p120, %p121
      %p123 = scmp.ne.s32.totalorder %s114, %s115
      %p124 = scmp.eq.s32.totalorder %s22, 0
      %p125 = por %p123, %p124
      %p126 = scmp.ne.s32.totalorder %s114, %s115
      %p127 = scmp.eq.s32.totalorder %s23, 8
      %p128 = por %p126, %p127
      %p130 = scmp.ne.s32.totalorder %s115, %s129
      %p131 = scmp.eq.s32.totalorder %s23, 0
      %p132 = por %p130, %p131
      %s134 = sadd.s32 %s133, 1
      %p137 = scmp.eq.s32.totalorder %s17, 8
      %p138 = scmp.ne.s32.totalorder %s133, %s135
      %p139 = scmp.eq.s32.totalorder %s17, 0
      %p140 = por %p138, %p139
      %p141 = scmp.ne.s32.totalorder %s133, %s135
      %p142 = scmp.eq.s32.totalorder %s22, 8
      %p143 = por %p141, %p142
      %p144 = scmp.ne.s32.totalorder %s135, %s136
      %p145 = scmp.eq.s32.totalorder %s22, 0
      %p146 = por %p144, %p145
      %p147 = scmp.ne.s32.totalorder %s135, %s136
      %p148 = scmp.eq.s32.totalorder %s23, 8
      %p149 = por %p147, %p148
      %p151 = scmp.ne.s32.totalorder %s136, %s150
      %p152 = scmp.eq.s32.totalorder %s23, 0
      %p153 = por %p151, %p152
      %s154 = ssub.s32 %s24, %s36
      %p155 = scmp.eq.s32.totalorder %s154, 0
      %s157 = sadd.s32 %s156, 1
      %s158 = scalar_select %p155, %s156, %s157
      %p161 = pneg %p155
      %p162 = scmp.eq.s32.totalorder %s17, 8
      %p163 = por %p161, %p162
      %p164 = scmp.ne.s32.totalorder %s156, %s159
      %p165 = scmp.eq.s32.totalorder %s17, 0
      %p166 = por %p164, %p165
      %p167 = scmp.ne.s32.totalorder %s156, %s159
      %p168 = scmp.eq.s32.totalorder %s22, 8
      %p169 = por %p167, %p168
      %p170 = scmp.ne.s32.totalorder %s159, %s160
      %p171 = scmp.eq.s32.totalorder %s22, 0
      %p172 = por %p170, %p171
      %p173 = scmp.ne.s32.totalorder %s159, %s160
      %p174 = scmp.eq.s32.totalorder %s23, 8
      %p175 = por %p173, %p174
      %p177 = scmp.ne.s32.totalorder %s160, %s176
      %p178 = scmp.eq.s32.totalorder %s23, 0
      %p179 = por %p177, %p178
      %p180 = scmp.le.s32.totalorder 1, %s17
      %p181 = scmp.lt.s32.totalorder %s17, 10
      %p182 = pnand %p180, %p181
      %p183 = pneg %p182
      // Predicated region
      $region9: #{tpu_custom_call.1} parent=5 // pred_check
        _
      $region10: #{tpu_custom_call.1} parent=5 // pred_check_branch
        %185 = sbr.rel (%p182) target = $region12
      $region11: #{tpu_custom_call.1} parent=5 // pred_region
        %s186 = ssub.s32 %s17, 1
        // Predicated region
        $region13: #{tpu_custom_call.1} parent=11 // pred_check
          %p187 = pneg %p78
        $region14: #{tpu_custom_call.1} parent=11 // pred_check_branch
          %189 = sbr.rel (%p187) target = $region16
        $region15: #{tpu_custom_call.1} parent=11 // pred_region
          _
        $region16: #{tpu_custom_call.1} parent=11 // pred_fallthru
          _
        // Predicated region
        $region17: #{tpu_custom_call.1} parent=11 // pred_check
          %p190 = pneg %p125
        $region18: #{tpu_custom_call.1} parent=11 // pred_check_branch
          %192 = sbr.rel (%p190) target = $region20
        $region19: #{tpu_custom_call.1} parent=11 // pred_region
          _
        $region20: #{tpu_custom_call.1} parent=11 // pred_fallthru
          _
        // Predicated region
        $region21: #{tpu_custom_call.1} parent=11 // pred_check
          %p193 = pneg %p146
        $region22: #{tpu_custom_call.1} parent=11 // pred_check_branch
          %195 = sbr.rel (%p193) target = $region24
        $region23: #{tpu_custom_call.1} parent=11 // pred_region
          _
        $region24: #{tpu_custom_call.1} parent=11 // pred_fallthru
          _
      $region12: #{tpu_custom_call.1} parent=5 // pred_fallthru
        _
      %p196 = scmp.lt.s32.totalorder %s17, 9
      // Predicated region
      $region25: #{tpu_custom_call.1} parent=5 // pred_check
        %p197 = pneg %p196
      $region26: #{tpu_custom_call.1} parent=5 // pred_check_branch
        %199 = sbr.rel (%p197) target = $region28
      $region27: #{tpu_custom_call.1} parent=5 // pred_region
        // Predicated region
        $region29: #{tpu_custom_call.1} parent=27 // pred_check
          %p200 = pneg %p51
        $region30: #{tpu_custom_call.1} parent=27 // pred_check_branch
          %202 = sbr.rel (%p200) target = $region32
        $region31: #{tpu_custom_call.1} parent=27 // pred_region
          %s203 = sand.u32 %s41, 1
          %s204 = scalar_lea.sflag [#allocation4], %s203
          %s205 = sand.u32 %s41, 1
          %s206 = smul.addr %s205, 64
          %s207 = scalar_lea.vmem [#allocation3], %s206
          %s208 = smul.u32 16, %s24
          %s210 = ssub.s32 1024, 1024
          %211 = vsyncadd %s204, %s210
          %s212 = smul.addr %s208, 3
          %s213 = sadd.s32 %s25, %s212
          %s214 = smul.addr %s213, 64
          %s215 = scalar_lea.hbm %s0, %s214
          %s216 = sshll.u32 %s207, 4
          %s217 = int_to_ptr.vmem [resolvable:$true] %s216
          %222 = dma.hbm_to_vmem [thread:$0]  %s215, 1024, %s217, %s204, 192, 64, 4
        $region32: #{tpu_custom_call.1} parent=27 // pred_fallthru
          _
        // Predicated region
        $region33: #{tpu_custom_call.1} parent=27 // pred_check
          %p223 = pneg %p98
        $region34: #{tpu_custom_call.1} parent=27 // pred_check_branch
          %225 = sbr.rel (%p223) target = $region36
        $region35: #{tpu_custom_call.1} parent=27 // pred_region
          %s226 = smul.u32 16, %s24
          %p227 = scmp.lt.s32.totalorder %s226, 47
          %s228 = scalar_select %p227, %s226, 47
          %s229 = smul.addr %s228, 8
          %s230 = scalar_lea.vmem %s2, %s229
          %s231 = smul.u32 16, %s24
        $region36: #{tpu_custom_call.1} parent=27 // pred_fallthru
          _
      $region28: #{tpu_custom_call.1} parent=5 // pred_fallthru
        _
      %p232 = scmp.le.s32.totalorder 1, %s17
      %p233 = scmp.lt.s32.totalorder %s17, 10
      %p234 = pnand %p232, %p233
      %p235 = pneg %p234
      // Predicated region
      $region37: #{tpu_custom_call.1} parent=5 // pred_check
        _
      $region38: #{tpu_custom_call.1} parent=5 // pred_check_branch
        %237 = sbr.rel (%p234) target = $region40
      $region39: #{tpu_custom_call.1} parent=5 // pred_region
        %s238 = ssub.s32 %s17, 1
        %s239 = sand.u32 %s44, 1
        %s240 = scalar_lea.sflag [#allocation4], %s239
        %s241 = sand.u32 %s44, 1
        %s242 = smul.addr %s241, 64
        %s243 = scalar_lea.vmem [#allocation3], %s242
        // Predicated region
        $region41: #{tpu_custom_call.1} parent=39 // pred_check
          %p244 = pneg %p57
        $region42: #{tpu_custom_call.1} parent=39 // pred_check_branch
          %246 = sbr.rel (%p244) target = $region44
        $region43: #{tpu_custom_call.1} parent=39 // pred_region
          %247 = dma.done %s240, 1024
        $region44: #{tpu_custom_call.1} parent=39 // pred_fallthru
          _
        %s248 = sand.u32 %s44, 1
        %s249 = scalar_lea.sflag [#allocation4], %s248
        %s250 = sand.u32 %s44, 1
        %s251 = smul.addr %s250, 64
        %s252 = scalar_lea.vmem [#allocation3], %s251
        %p253 = pneg %p57
        %p254 = pneg %p54
        %p255 = pneg %p78
        %p256 = pneg %p75
        %s257 = smul.u32 16, %s26
        %p258 = scmp.lt.s32.totalorder %s257, 47
        %s259 = scalar_select %p258, %s257, 47
        %s260 = smul.addr %s259, 8
        %s261 = scalar_lea.vmem %s2, %s260
        %p262 = pneg %p104
        %p263 = pneg %p101
        %p264 = pneg %p125
        %p265 = pneg %p122
        %p266 = pneg %p146
        %p267 = pneg %p143
        %p268 = pneg %p172
        %p269 = pneg %p169
        %s270 = sand.u32 %s159, 1
        %s271 = scalar_lea.sflag [#allocation5], %s270
        %s272 = sand.u32 %s159, 1
        %s273 = smul.addr %s272, 64
        %s274 = scalar_lea.vmem [#allocation6], %s273
        %s275 = smul.u32 16, %s26
        %s276 = smul.u32 16, %s26
        %p277 = scmp.lt.s32.totalorder %s276, 47
        %s278 = scalar_select %p277, %s276, 47
        %s279 = smul.addr %s278, 8
        %s280 = scalar_lea.vmem %s2, %s279
        %s281 = smul.u32 16, %s26
        %s282 = smul.u32 16, %s26
        %p284 = scmp.eq.s32.totalorder %s27, 0
        // Predicated region
        $region45: #{tpu_custom_call.1} parent=39 // pred_check
          %p285 = pneg %p284
        $region46: #{tpu_custom_call.1} parent=39 // pred_check_branch
          %287 = sbr.rel (%p285) target = $region48
        $region47: #{tpu_custom_call.1} parent=39 // pred_region
          %288 = vst [vmem:[#allocation2] sm:$0xff] 0.0
          %289 = vst [vmem:[#allocation2 + $0x8] sm:$0xff] 0.0
          %290 = vst [vmem:[#allocation2 + $0x10] sm:$0xff] 0.0
          %291 = vst [vmem:[#allocation2 + $0x18] sm:$0xff] 0.0
          %292 = vst [vmem:[#allocation2 + $0x20] sm:$0xff] 0.0
          %293 = vst [vmem:[#allocation2 + $0x28] sm:$0xff] 0.0
          %294 = vst [vmem:[#allocation2 + $0x30] sm:$0xff] 0.0
          %295 = vst [vmem:[#allocation2 + $0x38] sm:$0xff] 0.0
          %296 = vst [vmem:[#allocation2 + $0x40] sm:$0xff] 0.0
          %297 = vst [vmem:[#allocation2 + $0x48] sm:$0xff] 0.0
          %298 = vst [vmem:[#allocation2 + $0x50] sm:$0xff] 0.0
          %299 = vst [vmem:[#allocation2 + $0x58] sm:$0xff] 0.0
          %300 = vst [vmem:[#allocation2 + $0x60] sm:$0xff] 0.0
          %301 = vst [vmem:[#allocation2 + $0x68] sm:$0xff] 0.0
          %302 = vst [vmem:[#allocation2 + $0x70] sm:$0xff] 0.0
          %303 = vst [vmem:[#allocation2 + $0x78] sm:$0xff] 0.0
        $region48: #{tpu_custom_call.1} parent=39 // pred_fallthru
          _
        %s304 = smul.u32 %s27, 128
        %s305 = sshra.s32 %s304, 3
        %s306 = sand.u32 %s304, 7
        %s307 = smul.addr %s305, 4
        %s308 = scalar_lea.vmem %s1, %s307
        %v309 = vld [vmem:[%s308] sm:$0xf]
        %v310 = vld [vmem:[%s308 + $0x4] sm:$0xf]
        %v311 = vld [vmem:[%s308 + $0x8] sm:$0xf]
        %v312 = vld [vmem:[%s308 + $0xc] sm:$0xf]
        %v313 = vld [vmem:[%s308 + $0x10] sm:$0xf]
        %v314 = vld [vmem:[%s308 + $0x14] sm:$0xf]
        %v315 = vld [vmem:[%s308 + $0x18] sm:$0xf]
        %v316 = vld [vmem:[%s308 + $0x1c] sm:$0xf]
        %v317 = vld [vmem:[%s308 + $0x20] sm:$0xf]
        %v318 = vld [vmem:[%s308 + $0x24] sm:$0xf]
        %v319 = vld [vmem:[%s308 + $0x28] sm:$0xf]
        %v320 = vld [vmem:[%s308 + $0x2c] sm:$0xf]
        %v321 = vld [vmem:[%s308 + $0x30] sm:$0xf]
        %v322 = vld [vmem:[%s308 + $0x34] sm:$0xf]
        %v323 = vld [vmem:[%s308 + $0x38] sm:$0xf]
        %v324 = vld [vmem:[%s308 + $0x3c] sm:$0xf]
        %v325 = vld [vmem:[#allocation2] sm:$0xff]
        %v326 = vld [vmem:[#allocation2 + $0x8] sm:$0xff]
        %v327 = vld [vmem:[#allocation2 + $0x10] sm:$0xff]
        %v328 = vld [vmem:[#allocation2 + $0x18] sm:$0xff]
        %v329 = vld [vmem:[#allocation2 + $0x20] sm:$0xff]
        %v330 = vld [vmem:[#allocation2 + $0x28] sm:$0xff]
        %v331 = vld [vmem:[#allocation2 + $0x30] sm:$0xff]
        %v332 = vld [vmem:[#allocation2 + $0x38] sm:$0xff]
        %v333 = vld [vmem:[#allocation2 + $0x40] sm:$0xff]
        %v334 = vld [vmem:[#allocation2 + $0x48] sm:$0xff]
        %v335 = vld [vmem:[#allocation2 + $0x50] sm:$0xff]
        %v336 = vld [vmem:[#allocation2 + $0x58] sm:$0xff]
        %v337 = vld [vmem:[#allocation2 + $0x60] sm:$0xff]
        %v338 = vld [vmem:[#allocation2 + $0x68] sm:$0xff]
        %v339 = vld [vmem:[#allocation2 + $0x70] sm:$0xff]
        %v340 = vld [vmem:[#allocation2 + $0x78] sm:$0xff]
        %v341 = vld [vmem:[%s243] sm:$0xf]
        %v342 = vld [vmem:[%s243 + $0x4] sm:$0xf]
        %v343 = vld [vmem:[%s243 + $0x8] sm:$0xf]
        %v344 = vld [vmem:[%s243 + $0xc] sm:$0xf]
        %v345 = vld [vmem:[%s243 + $0x10] sm:$0xf]
        %v346 = vld [vmem:[%s243 + $0x14] sm:$0xf]
        %v347 = vld [vmem:[%s243 + $0x18] sm:$0xf]
        %v348 = vld [vmem:[%s243 + $0x1c] sm:$0xf]
        %v349 = vld [vmem:[%s243 + $0x20] sm:$0xf]
        %v350 = vld [vmem:[%s243 + $0x24] sm:$0xf]
        %v351 = vld [vmem:[%s243 + $0x28] sm:$0xf]
        %v352 = vld [vmem:[%s243 + $0x2c] sm:$0xf]
        %v353 = vld [vmem:[%s243 + $0x30] sm:$0xf]
        %v354 = vld [vmem:[%s243 + $0x34] sm:$0xf]
        %v355 = vld [vmem:[%s243 + $0x38] sm:$0xf]
        %v356 = vld [vmem:[%s243 + $0x3c] sm:$0xf]
        %v373 = vunpack.c.l.b16 %v341
        %v374 = vunpack.c.l.b16 %v342
        %v375 = vunpack.c.l.b16 %v343
        %v376 = vunpack.c.l.b16 %v344
        %v377 = vunpack.c.l.b16 %v345
        %v378 = vunpack.c.l.b16 %v346
        %v379 = vunpack.c.l.b16 %v347
        %v380 = vunpack.c.l.b16 %v348
        %v381 = vunpack.c.l.b16 %v349
        %v382 = vunpack.c.l.b16 %v350
        %v383 = vunpack.c.l.b16 %v351
        %v384 = vunpack.c.l.b16 %v352
        %v385 = vunpack.c.l.b16 %v353
        %v386 = vunpack.c.l.b16 %v354
        %v387 = vunpack.c.l.b16 %v355
        %v388 = vunpack.c.l.b16 %v356
        %v389 = vpack.c.b16 %v374, %v373
        %v390 = vpack.c.b16 %v376, %v375
        %v391 = vpack.c.b16 %v378, %v377
        %v392 = vpack.c.b16 %v380, %v379
        %v393 = vpack.c.b16 %v382, %v381
        %v394 = vpack.c.b16 %v384, %v383
        %v395 = vpack.c.b16 %v386, %v385
        %v396 = vpack.c.b16 %v388, %v387
        %v421 = vunpack.c.l.b16 %v309
        %v422 = vunpack.c.l.b16 %v310
        %v423 = vunpack.c.l.b16 %v311
        %v424 = vunpack.c.l.b16 %v312
        %v425 = vunpack.c.l.b16 %v313
        %v426 = vunpack.c.l.b16 %v314
        %v427 = vunpack.c.l.b16 %v315
        %v428 = vunpack.c.l.b16 %v316
        %v429 = vunpack.c.l.b16 %v317
        %v430 = vunpack.c.l.b16 %v318
        %v431 = vunpack.c.l.b16 %v319
        %v432 = vunpack.c.l.b16 %v320
        %v433 = vunpack.c.l.b16 %v321
        %v434 = vunpack.c.l.b16 %v322
        %v435 = vunpack.c.l.b16 %v323
        %v436 = vunpack.c.l.b16 %v324
        %v437 = vpack.c.b16 %v422, %v421
        %v438 = vpack.c.b16 %v424, %v423
        %v439 = vpack.c.b16 %v426, %v425
        %v440 = vpack.c.b16 %v428, %v427
        %v441 = vpack.c.b16 %v430, %v429
        %v442 = vpack.c.b16 %v432, %v431
        %v443 = vpack.c.b16 %v434, %v433
        %v444 = vpack.c.b16 %v436, %v435
        %453 = vmatprep.subr.bf16.mxu0 0
        %454 = vmatpush1.bf16.msra.mxu0 %v437
        %455 = vmatprep.subr.bf16.mxu0 0
        %456 = vmatpush1.bf16.msra.mxu0 %v438
        %457 = vmatprep.subr.bf16.mxu0 0
        %458 = vmatpush1.bf16.msra.mxu0 %v439
        %459 = vmatprep.subr.bf16.mxu0 0
        %460 = vmatpush1.bf16.msra.mxu0 %v440
        %461 = vmatprep.subr.bf16.mxu0 0
        %462 = vmatpush1.bf16.msra.mxu0 %v441
        %463 = vmatprep.subr.bf16.mxu0 0
        %464 = vmatpush1.bf16.msra.mxu0 %v442
        %465 = vmatprep.subr.bf16.mxu0 0
        %466 = vmatpush1.bf16.msra.mxu0 %v443
        %467 = vmatprep.subr.bf16.mxu0 0
        %468 = vmatpush1.bf16.msra.mxu0 %v444
        %469 = vmatprep.subr.bf16.mxu0 0
        %470 = vmatpush1.bf16.msra.mxu0 0
        %471 = vmatprep.subr.bf16.mxu0 0
        %472 = vmatpush1.bf16.msra.mxu0 0
        %473 = vmatprep.subr.bf16.mxu0 0
        %474 = vmatpush1.bf16.msra.mxu0 0
        %475 = vmatprep.subr.bf16.mxu0 0
        %476 = vmatpush1.bf16.msra.mxu0 0
        %477 = vmatprep.subr.bf16.mxu0 0
        %478 = vmatpush1.bf16.msra.mxu0 0
        %479 = vmatprep.subr.bf16.mxu0 0
        %480 = vmatpush1.bf16.msra.mxu0 0
        %481 = vmatprep.subr.bf16.mxu0 0
        %482 = vmatpush1.bf16.msra.mxu0 0
        %483 = vmatprep.subr.bf16.mxu0 0
        %484 = vmatpush1.bf16.msra.mxu0 0
        %485 = vmatprep.mubr.bf16.mxu0 0
        %486 = vmatmul.mubr.bf16.gmra.mrb[0].mxu0 %v389
        %v487 = vpop.f32.mrb[0].mxu0
        %v488 = vadd.f32 0.0, %v487
        %v489 = vpop.f32.mrb[0].mxu0
        %v490 = vpop.f32.mrb[0].mxu0
        %v491 = vadd.f32 0.0, %v490
        %v492 = vpop.f32.mrb[0].mxu0
        %493 = vmatprep.mubr.bf16.mxu0 0
        %494 = vmatmul.mubr.bf16.gmra.mrb[0].mxu0 %v390
        %v495 = vpop.f32.mrb[0].mxu0
        %v496 = vadd.f32 0.0, %v495
        %v497 = vpop.f32.mrb[0].mxu0
        %v498 = vpop.f32.mrb[0].mxu0
        %v499 = vadd.f32 0.0, %v498
        %v500 = vpop.f32.mrb[0].mxu0
        %501 = vmatprep.mubr.bf16.mxu0 0
        %502 = vmatmul.mubr.bf16.gmra.mrb[0].mxu0 %v391
        %v503 = vpop.f32.mrb[0].mxu0
        %v504 = vadd.f32 0.0, %v503
        %v505 = vpop.f32.mrb[0].mxu0
        %v506 = vpop.f32.mrb[0].mxu0
        %v507 = vadd.f32 0.0, %v506
        %v508 = vpop.f32.mrb[0].mxu0
        %509 = vmatprep.mubr.bf16.mxu0 0
        %510 = vmatmul.mubr.bf16.gmra.mrb[0].mxu0 %v392
        %v511 = vpop.f32.mrb[0].mxu0
        %v512 = vadd.f32 0.0, %v511
        %v513 = vpop.f32.mrb[0].mxu0
        %v514 = vpop.f32.mrb[0].mxu0
        %v515 = vadd.f32 0.0, %v514
        %v516 = vpop.f32.mrb[0].mxu0
        %517 = vmatprep.mubr.bf16.mxu0 0
        %518 = vmatmul.mubr.bf16.gmra.mrb[0].mxu0 %v393
        %v519 = vpop.f32.mrb[0].mxu0
        %v520 = vadd.f32 0.0, %v519
        %v521 = vpop.f32.mrb[0].mxu0
        %v522 = vpop.f32.mrb[0].mxu0
        %v523 = vadd.f32 0.0, %v522
        %v524 = vpop.f32.mrb[0].mxu0
        %525 = vmatprep.mubr.bf16.mxu0 0
        %526 = vmatmul.mubr.bf16.gmra.mrb[0].mxu0 %v394
        %v527 = vpop.f32.mrb[0].mxu0
        %v528 = vadd.f32 0.0, %v527
        %v529 = vpop.f32.mrb[0].mxu0
        %v530 = vpop.f32.mrb[0].mxu0
        %v531 = vadd.f32 0.0, %v530
        %v532 = vpop.f32.mrb[0].mxu0
        %533 = vmatprep.mubr.bf16.mxu0 0
        %534 = vmatmul.mubr.bf16.gmra.mrb[0].mxu0 %v395
        %v535 = vpop.f32.mrb[0].mxu0
        %v536 = vadd.f32 0.0, %v535
        %v537 = vpop.f32.mrb[0].mxu0
        %v538 = vpop.f32.mrb[0].mxu0
        %v539 = vadd.f32 0.0, %v538
        %v540 = vpop.f32.mrb[0].mxu0
        %541 = vmatprep.mubr.bf16.mxu0 0
        %542 = vmatmul.mubr.bf16.gmra.mrb[0].mxu0 %v396
        %v543 = vpop.f32.mrb[0].mxu0
        %v544 = vadd.f32 0.0, %v543
        %v545 = vpop.f32.mrb[0].mxu0
        %v546 = vpop.f32.mrb[0].mxu0
        %v547 = vadd.f32 0.0, %v546
        %v548 = vpop.f32.mrb[0].mxu0
        %549 = vdwg.mxu0
        %v550 = vadd.f32 %v325, %v488
        %v551 = vadd.f32 %v326, %v491
        %v552 = vadd.f32 %v327, %v496
        %v553 = vadd.f32 %v328, %v499
        %v554 = vadd.f32 %v329, %v504
        %v555 = vadd.f32 %v330, %v507
        %v556 = vadd.f32 %v331, %v512
        %v557 = vadd.f32 %v332, %v515
        %v558 = vadd.f32 %v333, %v520
        %v559 = vadd.f32 %v334, %v523
        %v560 = vadd.f32 %v335, %v528
        %v561 = vadd.f32 %v336, %v531
        %v562 = vadd.f32 %v337, %v536
        %v563 = vadd.f32 %v338, %v539
        %v564 = vadd.f32 %v339, %v544
        %v565 = vadd.f32 %v340, %v547
        %566 = vst [vmem:[#allocation2] sm:$0xff] %v550
        %567 = vst [vmem:[#allocation2 + $0x8] sm:$0xff] %v551
        %568 = vst [vmem:[#allocation2 + $0x10] sm:$0xff] %v552
        %569 = vst [vmem:[#allocation2 + $0x18] sm:$0xff] %v553
        %570 = vst [vmem:[#allocation2 + $0x20] sm:$0xff] %v554
        %571 = vst [vmem:[#allocation2 + $0x28] sm:$0xff] %v555
        %572 = vst [vmem:[#allocation2 + $0x30] sm:$0xff] %v556
        %573 = vst [vmem:[#allocation2 + $0x38] sm:$0xff] %v557
        %574 = vst [vmem:[#allocation2 + $0x40] sm:$0xff] %v558
        %575 = vst [vmem:[#allocation2 + $0x48] sm:$0xff] %v559
        %576 = vst [vmem:[#allocation2 + $0x50] sm:$0xff] %v560
        %577 = vst [vmem:[#allocation2 + $0x58] sm:$0xff] %v561
        %578 = vst [vmem:[#allocation2 + $0x60] sm:$0xff] %v562
        %579 = vst [vmem:[#allocation2 + $0x68] sm:$0xff] %v563
        %580 = vst [vmem:[#allocation2 + $0x70] sm:$0xff] %v564
        %581 = vst [vmem:[#allocation2 + $0x78] sm:$0xff] %v565
        %p582 = scmp.eq.s32.totalorder %s27, 2
        // Predicated region
        $region49: #{tpu_custom_call.1} parent=39 // pred_check
          %p583 = pneg %p582
        $region50: #{tpu_custom_call.1} parent=39 // pred_check_branch
          %585 = sbr.rel (%p583) target = $region52
        $region51: #{tpu_custom_call.1} parent=39 // pred_region
          %v586 = vld [vmem:[%s280] sm:$0xff]
          %v587 = vld [vmem:[%s280 + $0x8] sm:$0xff]
          %v588 = vld [vmem:[%s280 + $0x10] sm:$0xff]
          %v589 = vld [vmem:[%s280 + $0x18] sm:$0xff]
          %v590 = vld [vmem:[%s280 + $0x20] sm:$0xff]
          %v591 = vld [vmem:[%s280 + $0x28] sm:$0xff]
          %v592 = vld [vmem:[%s280 + $0x30] sm:$0xff]
          %v593 = vld [vmem:[%s280 + $0x38] sm:$0xff]
          %v594 = vld [vmem:[%s280 + $0x40] sm:$0xff]
          %v595 = vld [vmem:[%s280 + $0x48] sm:$0xff]
          %v596 = vld [vmem:[%s280 + $0x50] sm:$0xff]
          %v597 = vld [vmem:[%s280 + $0x58] sm:$0xff]
          %v598 = vld [vmem:[%s280 + $0x60] sm:$0xff]
          %v599 = vld [vmem:[%s280 + $0x68] sm:$0xff]
          %v600 = vld [vmem:[%s280 + $0x70] sm:$0xff]
          %v601 = vld [vmem:[%s280 + $0x78] sm:$0xff]
          %v602 = vld [vmem:[#allocation2] sm:$0xff]
          %v603 = vld [vmem:[#allocation2 + $0x8] sm:$0xff]
          %v604 = vld [vmem:[#allocation2 + $0x10] sm:$0xff]
          %v605 = vld [vmem:[#allocation2 + $0x18] sm:$0xff]
          %v606 = vld [vmem:[#allocation2 + $0x20] sm:$0xff]
          %v607 = vld [vmem:[#allocation2 + $0x28] sm:$0xff]
          %v608 = vld [vmem:[#allocation2 + $0x30] sm:$0xff]
          %v609 = vld [vmem:[#allocation2 + $0x38] sm:$0xff]
          %v610 = vld [vmem:[#allocation2 + $0x40] sm:$0xff]
          %v611 = vld [vmem:[#allocation2 + $0x48] sm:$0xff]
          %v612 = vld [vmem:[#allocation2 + $0x50] sm:$0xff]
          %v613 = vld [vmem:[#allocation2 + $0x58] sm:$0xff]
          %v614 = vld [vmem:[#allocation2 + $0x60] sm:$0xff]
          %v615 = vld [vmem:[#allocation2 + $0x68] sm:$0xff]
          %v616 = vld [vmem:[#allocation2 + $0x70] sm:$0xff]
          %v617 = vld [vmem:[#allocation2 + $0x78] sm:$0xff]
          %v618 = vld [vmem:[%s3] sm:$0xff]
          %v619 = vld [vmem:[%s3 + $0x8] sm:$0xff]
          %v620 = vld [vmem:[%s3 + $0x10] sm:$0xff]
          %v621 = vld [vmem:[%s3 + $0x18] sm:$0xff]
          %v622 = vld [vmem:[%s3 + $0x20] sm:$0xff]
          %v623 = vld [vmem:[%s3 + $0x28] sm:$0xff]
          %v624 = vld [vmem:[%s3 + $0x30] sm:$0xff]
          %v625 = vld [vmem:[%s3 + $0x38] sm:$0xff]
          %v626 = vld [vmem:[%s3 + $0x40] sm:$0xff]
          %v627 = vld [vmem:[%s3 + $0x48] sm:$0xff]
          %v628 = vld [vmem:[%s3 + $0x50] sm:$0xff]
          %v629 = vld [vmem:[%s3 + $0x58] sm:$0xff]
          %v630 = vld [vmem:[%s3 + $0x60] sm:$0xff]
          %v631 = vld [vmem:[%s3 + $0x68] sm:$0xff]
          %v632 = vld [vmem:[%s3 + $0x70] sm:$0xff]
          %v633 = vld [vmem:[%s3 + $0x78] sm:$0xff]
          %634 = vmatprep.subr.mxu0 0.0
          %635 = vmatpush1.msra.mxu0 %v618
          %636 = vmatprep.subr.mxu0 0.0
          %637 = vmatpush1.msra.mxu0 %v619
          %638 = vmatprep.subr.mxu0 0.0
          %639 = vmatpush1.msra.mxu0 %v620
          %640 = vmatprep.subr.mxu0 0.0
          %641 = vmatpush1.msra.mxu0 %v621
          %642 = vmatprep.subr.mxu0 0.0
          %643 = vmatpush1.msra.mxu0 %v622
          %644 = vmatprep.subr.mxu0 0.0
          %645 = vmatpush1.msra.mxu0 %v623
          %646 = vmatprep.subr.mxu0 0.0
          %647 = vmatpush1.msra.mxu0 %v624
          %648 = vmatprep.subr.mxu0 0.0
          %649 = vmatpush1.msra.mxu0 %v625
          %650 = vmatprep.subr.mxu0 0.0
          %651 = vmatpush1.msra.mxu0 %v626
          %652 = vmatprep.subr.mxu0 0.0
          %653 = vmatpush1.msra.mxu0 %v627
          %654 = vmatprep.subr.mxu0 0.0
          %655 = vmatpush1.msra.mxu0 %v628
          %656 = vmatprep.subr.mxu0 0.0
          %657 = vmatpush1.msra.mxu0 %v629
          %658 = vmatprep.subr.mxu0 0.0
          %659 = vmatpush1.msra.mxu0 %v630
          %660 = vmatprep.subr.mxu0 0.0
          %661 = vmatpush1.msra.mxu0 %v631
          %662 = vmatprep.subr.mxu0 0.0
          %663 = vmatpush1.msra.mxu0 %v632
          %664 = vmatprep.subr.mxu0 0.0
          %665 = vmatpush1.msra.mxu0 %v633
          %666 = vmatprep.subr.mxu0 0.0
          %667 = vmatpush1.msra.mxu0 0.0
          %668 = vmatprep.subr.mxu0 0.0
          %669 = vmatpush1.msra.mxu0 0.0
          %670 = vmatprep.subr.mxu0 0.0
          %671 = vmatpush1.msra.mxu0 0.0
          %672 = vmatprep.subr.mxu0 0.0
          %673 = vmatpush1.msra.mxu0 0.0
          %674 = vmatprep.subr.mxu0 0.0
          %675 = vmatpush1.msra.mxu0 0.0
          %676 = vmatprep.subr.mxu0 0.0
          %677 = vmatpush1.msra.mxu0 0.0
          %678 = vmatprep.subr.mxu0 0.0
          %679 = vmatpush1.msra.mxu0 0.0
          %680 = vmatprep.subr.mxu0 0.0
          %681 = vmatpush1.msra.mxu0 0.0
          %682 = vmatprep.subr.mxu0 0.0
          %683 = vmatpush1.msra.mxu0 0.0
          %684 = vmatprep.subr.mxu0 0.0
          %685 = vmatpush1.msra.mxu0 0.0
          %686 = vmatprep.subr.mxu0 0.0
          %687 = vmatpush1.msra.mxu0 0.0
          %688 = vmatprep.subr.mxu0 0.0
          %689 = vmatpush1.msra.mxu0 0.0
          %690 = vmatprep.subr.mxu0 0.0
          %691 = vmatpush1.msra.mxu0 0.0
          %692 = vmatprep.subr.mxu0 0.0
          %693 = vmatpush1.msra.mxu0 0.0
          %694 = vmatprep.subr.mxu0 0.0
          %695 = vmatpush1.msra.mxu0 0.0
          %696 = vmatprep.subr.mxu0 0.0
          %697 = vmatpush1.msra.mxu0 0.0
          %698 = vmatprep.mubr.f32.mxu0 0.0
          %699 = vmatmul.mubr.f32.gmra.mrb[0].mxu0 %v602
          %v700 = vpop.f32.mrb[0].mxu0
          %v701 = vadd.f32 0.0, %v700
          %v702 = vpop.f32.mrb[0].mxu0
          %703 = vmatprep.mubr.f32.mxu0 0.0
          %704 = vmatmul.mubr.f32.gmra.mrb[0].mxu0 %v603
          %v705 = vpop.f32.mrb[0].mxu0
          %v706 = vadd.f32 0.0, %v705
          %v707 = vpop.f32.mrb[0].mxu0
          %708 = vmatprep.mubr.f32.mxu0 0.0
          %709 = vmatmul.mubr.f32.gmra.mrb[0].mxu0 %v604
          %v710 = vpop.f32.mrb[0].mxu0
          %v711 = vadd.f32 0.0, %v710
          %v712 = vpop.f32.mrb[0].mxu0
          %713 = vmatprep.mubr.f32.mxu0 0.0
          %714 = vmatmul.mubr.f32.gmra.mrb[0].mxu0 %v605
          %v715 = vpop.f32.mrb[0].mxu0
          %v716 = vadd.f32 0.0, %v715
          %v717 = vpop.f32.mrb[0].mxu0
          %718 = vmatprep.mubr.f32.mxu0 0.0
          %719 = vmatmul.mubr.f32.gmra.mrb[0].mxu0 %v606
          %v720 = vpop.f32.mrb[0].mxu0
          %v721 = vadd.f32 0.0, %v720
          %v722 = vpop.f32.mrb[0].mxu0
          %723 = vmatprep.mubr.f32.mxu0 0.0
          %724 = vmatmul.mubr.f32.gmra.mrb[0].mxu0 %v607
          %v725 = vpop.f32.mrb[0].mxu0
          %v726 = vadd.f32 0.0, %v725
          %v727 = vpop.f32.mrb[0].mxu0
          %728 = vmatprep.mubr.f32.mxu0 0.0
          %729 = vmatmul.mubr.f32.gmra.mrb[0].mxu0 %v608
          %v730 = vpop.f32.mrb[0].mxu0
          %v731 = vadd.f32 0.0, %v730
          %v732 = vpop.f32.mrb[0].mxu0
          %733 = vmatprep.mubr.f32.mxu0 0.0
          %734 = vmatmul.mubr.f32.gmra.mrb[0].mxu0 %v609
          %v735 = vpop.f32.mrb[0].mxu0
          %v736 = vadd.f32 0.0, %v735
          %v737 = vpop.f32.mrb[0].mxu0
          %738 = vmatprep.mubr.f32.mxu0 0.0
          %739 = vmatmul.mubr.f32.gmra.mrb[0].mxu0 %v610
          %v740 = vpop.f32.mrb[0].mxu0
          %v741 = vadd.f32 0.0, %v740
          %v742 = vpop.f32.mrb[0].mxu0
          %743 = vmatprep.mubr.f32.mxu0 0.0
          %744 = vmatmul.mubr.f32.gmra.mrb[0].mxu0 %v611
          %v745 = vpop.f32.mrb[0].mxu0
          %v746 = vadd.f32 0.0, %v745
          %v747 = vpop.f32.mrb[0].mxu0
          %748 = vmatprep.mubr.f32.mxu0 0.0
          %749 = vmatmul.mubr.f32.gmra.mrb[0].mxu0 %v612
          %v750 = vpop.f32.mrb[0].mxu0
          %v751 = vadd.f32 0.0, %v750
          %v752 = vpop.f32.mrb[0].mxu0
          %753 = vmatprep.mubr.f32.mxu0 0.0
          %754 = vmatmul.mubr.f32.gmra.mrb[0].mxu0 %v613
          %v755 = vpop.f32.mrb[0].mxu0
          %v756 = vadd.f32 0.0, %v755
          %v757 = vpop.f32.mrb[0].mxu0
          %758 = vmatprep.mubr.f32.mxu0 0.0
          %759 = vmatmul.mubr.f32.gmra.mrb[0].mxu0 %v614
          %v760 = vpop.f32.mrb[0].mxu0
          %v761 = vadd.f32 0.0, %v760
          %v762 = vpop.f32.mrb[0].mxu0
          %763 = vmatprep.mubr.f32.mxu0 0.0
          %764 = vmatmul.mubr.f32.gmra.mrb[0].mxu0 %v615
          %v765 = vpop.f32.mrb[0].mxu0
          %v766 = vadd.f32 0.0, %v765
          %v767 = vpop.f32.mrb[0].mxu0
          %768 = vmatprep.mubr.f32.mxu0 0.0
          %769 = vmatmul.mubr.f32.gmra.mrb[0].mxu0 %v616
          %v770 = vpop.f32.mrb[0].mxu0
          %v771 = vadd.f32 0.0, %v770
          %v772 = vpop.f32.mrb[0].mxu0
          %773 = vmatprep.mubr.f32.mxu0 0.0
          %774 = vmatmul.mubr.f32.gmra.mrb[0].mxu0 %v617
          %v775 = vpop.f32.mrb[0].mxu0
          %v776 = vadd.f32 0.0, %v775
          %v777 = vpop.f32.mrb[0].mxu0
          %778 = vdwg.mxu0
          %780 = vset.pattern.permute.xlu0 0
          %781 = vperm.xlu0 %780, %v586
          %v782 = vpop.permute.xlu0 %781
          %785 = vset.pattern.permute.xlu0 0
          %786 = vperm.xlu0 %785, %v587
          %v787 = vpop.permute.xlu0 %786
          %790 = vset.pattern.permute.xlu0 0
          %791 = vperm.xlu0 %790, %v588
          %v792 = vpop.permute.xlu0 %791
          %795 = vset.pattern.permute.xlu0 0
          %796 = vperm.xlu0 %795, %v589
          %v797 = vpop.permute.xlu0 %796
          %800 = vset.pattern.permute.xlu0 0
          %801 = vperm.xlu0 %800, %v590
          %v802 = vpop.permute.xlu0 %801
          %805 = vset.pattern.permute.xlu0 0
          %806 = vperm.xlu0 %805, %v591
          %v807 = vpop.permute.xlu0 %806
          %810 = vset.pattern.permute.xlu0 0
          %811 = vperm.xlu0 %810, %v592
          %v812 = vpop.permute.xlu0 %811
          %815 = vset.pattern.permute.xlu0 0
          %816 = vperm.xlu0 %815, %v593
          %v817 = vpop.permute.xlu0 %816
          %820 = vset.pattern.permute.xlu0 0
          %821 = vperm.xlu0 %820, %v594
          %v822 = vpop.permute.xlu0 %821
          %825 = vset.pattern.permute.xlu0 0
          %826 = vperm.xlu0 %825, %v595
          %v827 = vpop.permute.xlu0 %826
          %830 = vset.pattern.permute.xlu0 0
          %831 = vperm.xlu0 %830, %v596
          %v832 = vpop.permute.xlu0 %831
          %835 = vset.pattern.permute.xlu0 0
          %836 = vperm.xlu0 %835, %v597
          %v837 = vpop.permute.xlu0 %836
          %840 = vset.pattern.permute.xlu0 0
          %841 = vperm.xlu0 %840, %v598
          %v842 = vpop.permute.xlu0 %841
          %845 = vset.pattern.permute.xlu0 0
          %846 = vperm.xlu0 %845, %v599
          %v847 = vpop.permute.xlu0 %846
          %850 = vset.pattern.permute.xlu0 0
          %851 = vperm.xlu0 %850, %v600
          %v852 = vpop.permute.xlu0 %851
          %855 = vset.pattern.permute.xlu0 0
          %856 = vperm.xlu0 %855, %v601
          %v857 = vpop.permute.xlu0 %856
          %v859 = vmul.f32 %v782, %v701
          %v860 = vmul.f32 %v787, %v706
          %v861 = vmul.f32 %v792, %v711
          %v862 = vmul.f32 %v797, %v716
          %v863 = vmul.f32 %v802, %v721
          %v864 = vmul.f32 %v807, %v726
          %v865 = vmul.f32 %v812, %v731
          %v866 = vmul.f32 %v817, %v736
          %v867 = vmul.f32 %v822, %v741
          %v868 = vmul.f32 %v827, %v746
          %v869 = vmul.f32 %v832, %v751
          %v870 = vmul.f32 %v837, %v756
          %v871 = vmul.f32 %v842, %v761
          %v872 = vmul.f32 %v847, %v766
          %v873 = vmul.f32 %v852, %v771
          %v874 = vmul.f32 %v857, %v776
          %v875 = vld [vmem:[%s4] sm:$0x1]
          %v877 = vlaneseq
          %v878 = vshrl.u32 %v877, 7
          %v879 = vsub.s32 0, %v878
          %v880 = vrot.slane %v875, %v879
          %v882 = vadd.f32 %v859, %v880
          %v883 = vadd.f32 %v860, %v880
          %v884 = vadd.f32 %v861, %v880
          %v885 = vadd.f32 %v862, %v880
          %v886 = vadd.f32 %v863, %v880
          %v887 = vadd.f32 %v864, %v880
          %v888 = vadd.f32 %v865, %v880
          %v889 = vadd.f32 %v866, %v880
          %v890 = vadd.f32 %v867, %v880
          %v891 = vadd.f32 %v868, %v880
          %v892 = vadd.f32 %v869, %v880
          %v893 = vadd.f32 %v870, %v880
          %v894 = vadd.f32 %v871, %v880
          %v895 = vadd.f32 %v872, %v880
          %v896 = vadd.f32 %v873, %v880
          %v897 = vadd.f32 %v874, %v880
          %v898 = vmax.f32 %v882, 0.0
          %v899 = vmax.f32 %v883, 0.0
          %v900 = vmax.f32 %v884, 0.0
          %v901 = vmax.f32 %v885, 0.0
          %v902 = vmax.f32 %v886, 0.0
          %v903 = vmax.f32 %v887, 0.0
          %v904 = vmax.f32 %v888, 0.0
          %v905 = vmax.f32 %v889, 0.0
          %v906 = vmax.f32 %v890, 0.0
          %v907 = vmax.f32 %v891, 0.0
          %v908 = vmax.f32 %v892, 0.0
          %v909 = vmax.f32 %v893, 0.0
          %v910 = vmax.f32 %v894, 0.0
          %v911 = vmax.f32 %v895, 0.0
          %v912 = vmax.f32 %v896, 0.0
          %v913 = vmax.f32 %v897, 0.0
          %v914 = vmul.f32 %v782, %v898
          %v915 = vmul.f32 %v787, %v899
          %v916 = vmul.f32 %v792, %v900
          %v917 = vmul.f32 %v797, %v901
          %v918 = vmul.f32 %v802, %v902
          %v919 = vmul.f32 %v807, %v903
          %v920 = vmul.f32 %v812, %v904
          %v921 = vmul.f32 %v817, %v905
          %v922 = vmul.f32 %v822, %v906
          %v923 = vmul.f32 %v827, %v907
          %v924 = vmul.f32 %v832, %v908
          %v925 = vmul.f32 %v837, %v909
          %v926 = vmul.f32 %v842, %v910
          %v927 = vmul.f32 %v847, %v911
          %v928 = vmul.f32 %v852, %v912
          %v929 = vmul.f32 %v857, %v913
          %v930 = vpack.c.bf16 %v915, %v914
          %v931 = vpack.c.bf16 %v917, %v916
          %v932 = vpack.c.bf16 %v919, %v918
          %v933 = vpack.c.bf16 %v921, %v920
          %v934 = vpack.c.bf16 %v923, %v922
          %v935 = vpack.c.bf16 %v925, %v924
          %v936 = vpack.c.bf16 %v927, %v926
          %v937 = vpack.c.bf16 %v929, %v928
          %v946 = vunpack.c.l.b16 %v930
          %v947 = vunpack.c.h.b16 %v930
          %v948 = vunpack.c.l.b16 %v931
          %v949 = vunpack.c.h.b16 %v931
          %v950 = vunpack.c.l.b16 %v932
          %v951 = vunpack.c.h.b16 %v932
          %v952 = vunpack.c.l.b16 %v933
          %v953 = vunpack.c.h.b16 %v933
          %v954 = vunpack.c.l.b16 %v934
          %v955 = vunpack.c.h.b16 %v934
          %v956 = vunpack.c.l.b16 %v935
          %v957 = vunpack.c.h.b16 %v935
          %v958 = vunpack.c.l.b16 %v936
          %v959 = vunpack.c.h.b16 %v936
          %v960 = vunpack.c.l.b16 %v937
          %v961 = vunpack.c.h.b16 %v937
          %v962 = vpack.c.b16 %v946, %v946
          %v963 = vpack.c.b16 %v947, %v947
          %v964 = vpack.c.b16 %v948, %v948
          %v965 = vpack.c.b16 %v949, %v949
          %v966 = vpack.c.b16 %v950, %v950
          %v967 = vpack.c.b16 %v951, %v951
          %v968 = vpack.c.b16 %v952, %v952
          %v969 = vpack.c.b16 %v953, %v953
          %v970 = vpack.c.b16 %v954, %v954
          %v971 = vpack.c.b16 %v955, %v955
          %v972 = vpack.c.b16 %v956, %v956
          %v973 = vpack.c.b16 %v957, %v957
          %v974 = vpack.c.b16 %v958, %v958
          %v975 = vpack.c.b16 %v959, %v959
          %v976 = vpack.c.b16 %v960, %v960
          %v977 = vpack.c.b16 %v961, %v961
          %994 = vst [vmem:[%s274] sm:$0xf] %v962
          %995 = vst [vmem:[%s274 + $0x4] sm:$0xf] %v963
          %996 = vst [vmem:[%s274 + $0x8] sm:$0xf] %v964
          %997 = vst [vmem:[%s274 + $0xc] sm:$0xf] %v965
          %998 = vst [vmem:[%s274 + $0x10] sm:$0xf] %v966
          %999 = vst [vmem:[%s274 + $0x14] sm:$0xf] %v967
          %1000 = vst [vmem:[%s274 + $0x18] sm:$0xf] %v968
          %1001 = vst [vmem:[%s274 + $0x1c] sm:$0xf] %v969
          %1002 = vst [vmem:[%s274 + $0x20] sm:$0xf] %v970
          %1003 = vst [vmem:[%s274 + $0x24] sm:$0xf] %v971
          %1004 = vst [vmem:[%s274 + $0x28] sm:$0xf] %v972
          %1005 = vst [vmem:[%s274 + $0x2c] sm:$0xf] %v973
          %1006 = vst [vmem:[%s274 + $0x30] sm:$0xf] %v974
          %1007 = vst [vmem:[%s274 + $0x34] sm:$0xf] %v975
          %1008 = vst [vmem:[%s274 + $0x38] sm:$0xf] %v976
          %1009 = vst [vmem:[%s274 + $0x3c] sm:$0xf] %v977
        $region52: #{tpu_custom_call.1} parent=39 // pred_fallthru
          _
        %s1010 = sand.u32 %s159, 1
        %s1011 = scalar_lea.sflag [#allocation5], %s1010
        %s1012 = sand.u32 %s159, 1
        %s1013 = smul.addr %s1012, 64
        %s1014 = scalar_lea.vmem [#allocation6], %s1013
        // Predicated region
        $region53: #{tpu_custom_call.1} parent=39 // pred_check
          %p1015 = pneg %p169
        $region54: #{tpu_custom_call.1} parent=39 // pred_check_branch
          %1017 = sbr.rel (%p1015) target = $region56
        $region55: #{tpu_custom_call.1} parent=39 // pred_region
          %s1018 = smul.u32 16, %s26
          %s1020 = ssub.s32 1024, 1024
          %1021 = vsyncadd %s1011, %s1020
          %s1022 = smul.addr %s1018, 64
          %s1023 = scalar_lea.hbm %s5, %s1022
          %s1024 = sshll.u32 %s1014, 4
          %s1025 = int_to_ptr.vmem [resolvable:$true] %s1024
          %1030 = dma.vmem_to_hbm [thread:$0]  %s1025, 1024, %s1023, %s1011, 64, 64, 4
        $region56: #{tpu_custom_call.1} parent=39 // pred_fallthru
          _
      $region40: #{tpu_custom_call.1} parent=5 // pred_fallthru
        _
      %p1031 = scmp.le.s32.totalorder 2, %s17
      // Predicated region
      $region57: #{tpu_custom_call.1} parent=5 // pred_check
        %p1032 = pneg %p1031
      $region58: #{tpu_custom_call.1} parent=5 // pred_check_branch
        %1034 = sbr.rel (%p1032) target = $region60
      $region59: #{tpu_custom_call.1} parent=5 // pred_region
        %s1035 = ssub.s32 %s17, 2
        // Predicated region
        $region61: #{tpu_custom_call.1} parent=59 // pred_check
          %p1036 = pneg %p175
        $region62: #{tpu_custom_call.1} parent=59 // pred_check_branch
          %1038 = sbr.rel (%p1036) target = $region64
        $region63: #{tpu_custom_call.1} parent=59 // pred_region
          %s1039 = sand.u32 %s160, 1
          %s1040 = scalar_lea.sflag [#allocation5], %s1039
          %s1041 = sand.u32 %s160, 1
          %s1042 = smul.addr %s1041, 64
          %s1043 = scalar_lea.vmem [#allocation6], %s1042
          %1044 = dma.done %s1040, 1024
        $region64: #{tpu_custom_call.1} parent=59 // pred_fallthru
          _
      $region60: #{tpu_custom_call.1} parent=5 // pred_fallthru
        _
    $region6: #{tpu_custom_call.1} parent=1 // loop_footer
      %s21 = sadd.s32 1, %s17
    $region7: #{tpu_custom_call.1} parent=1 // loop_footer_branch
      %16 = sbr.rel target = $region3
    $region8: #{tpu_custom_call.1} parent=1 // loop_exit
      _
    %1045 = vsyncpa [#allocation4], 1
    %s1046 = scalar_lea.sflag [#allocation4], 1
    %1047 = vsyncpa %s1046, 1
    %1048 = vsyncpa [#allocation5], 1
    %s1049 = scalar_lea.sflag [#allocation5], 1
    %1050 = vsyncpa %s1049, 1

</llo_original>
